<compile_context>
chip_gen: v5e
topology: v5e:2x2
jax: 0.10.0
libtpu: 0.0.40
codegen_flags: <defaults>
</compile_context>

<pallas_src>
import functools

import jax
import jax.numpy as jnp
from jax.experimental import pallas as pl
from jax.experimental.pallas import tpu as pltpu


def _choose_row_tile(T, B, max_tile=2048):
    """Largest frame-row tile (multiple of 8, <= max_tile).  Prefer >= 2 grid
    steps (keeps both v7x TensorCores busy); tiny T falls back to an 8-aligned
    tile, split in two for odd batch counts when that costs no extra padding."""
    for cand in (2048, 1024, 512, 256, 128):
        if cand > max_tile:
            continue
        if T >= cand and (B >= 2 or T > cand):
            return cand
    t8 = min(max_tile, max(8, ((T + 7) // 8) * 8))
    if B % 2 == 1 and t8 >= 16:
        return ((t8 // 2 + 7) // 8) * 8      # two tiles -> even grid for v7x
    return t8


# ----------------------------- Pallas kernel ------------------------------

def _fused_kernel(tile_ref, wa_ref, ws_ref, out_ref, *, rt, R, S):
    # tile_ref : (rt + R - 1, S)  overlap-tiled signal chunks (bf16/f32)
    # wa_ref   : (R*S, C)         analysis weight, taps-major (zero-padded taps)
    # ws_ref   : (C, S)           synthesis weight (kernel == stride)
    # out_ref  : (rt, S)
    c = tile_ref[...]
    x = jnp.dot(c[0:rt, :], wa_ref[pl.ds(0, S), :],
                preferred_element_type=jnp.float32)
    for j in range(1, R):
        x = x + jnp.dot(c[j:j + rt, :], wa_ref[pl.ds(j * S, S), :],
                        preferred_element_type=jnp.float32)
    # TODO(synk): the U-Net mask estimator (DepthwiseNext / TrNext / FSA3Block /
    # TGRUBlock / SkipGate1) sources were not provided; Z is left as identity
    # of X (so the gate is SiLU) instead of being faked.
    z = x
    y = x * jax.nn.sigmoid(z)                       # f32 mask math; sigmoid -> EUP
    out_ref[...] = jnp.dot(y.astype(ws_ref.dtype), ws_ref[...],
                           preferred_element_type=jnp.float32
                           ).astype(out_ref.dtype)


def fused_analysis_mask_synthesis(tiles, w_analy_t, w_syn, rt, R, out_dtype):
    """tiles: (n_tiles, rt+R-1, S); w_analy_t: (R*S, C); w_syn: (C, S)."""
    n_tiles, crows, S = tiles.shape
    Kp, C = w_analy_t.shape
    kern = functools.partial(_fused_kernel, rt=rt, R=R, S=S)
    return pl.pallas_call(
        kern,
        out_shape=jax.ShapeDtypeStruct((n_tiles, rt, S), out_dtype),
        grid_spec=pltpu.PrefetchScalarGridSpec(
            num_scalar_prefetch=0,
            grid=(n_tiles,),
            in_specs=[
                pl.BlockSpec((None, crows, S), lambda i: (i, 0, 0)),
                pl.BlockSpec((Kp, C), lambda i: (0, 0)),   # resident weight
                pl.BlockSpec((C, S), lambda i: (0, 0)),    # resident weight
            ],
            out_specs=pl.BlockSpec((None, rt, S), lambda i: (i, 0, 0)),
        ),
        compiler_params=pltpu.CompilerParams(
            dimension_semantics=("parallel",),
            vmem_limit_bytes=32 * 1024 * 1024),
    )(tiles, w_analy_t, w_syn)


# ------------------------------ model wrapper ------------------------------

class CUNetHelperPallas:
    """JAX/Pallas port of CUNet_helper (padding + analysis + mask + synthesis)."""

    def __init__(self, n_kernel=384, n_stride=128, n_dim=256, seed=0,
                 use_bf16=True, out_dtype=jnp.float32):
        self.K = n_kernel
        self.S = n_stride
        self.C = n_dim
        self.R = -(-n_kernel // n_stride)       # S-chunks (taps of S) per frame
        self.op_dtype = jnp.bfloat16 if use_bf16 else jnp.float32
        self.out_dtype = out_dtype
        # f32 operands at 2048-row tiles would brush v5e's default scoped VMEM.
        self.max_tile = 2048 if use_bf16 else 1024

        k1, k2 = jax.random.split(jax.random.PRNGKey(seed))
        # nn.Conv1d(1, n_dim, n_kernel, bias=False): weight (n_dim, 1, n_kernel)
        lim_a = 1.0 / float(n_kernel) ** 0.5
        w_analy = jax.random.uniform(
            k1, (n_dim, 1, n_kernel), jnp.float32, -lim_a, lim_a)
        # nn.ConvTranspose1d(n_dim, 1, n_stride, stride=n_stride, bias=False)
        lim_s = 1.0 / float(n_stride) ** 0.5
        w_synth = jax.random.uniform(
            k2, (n_dim, 1, n_stride), jnp.float32, -lim_s, lim_s)

        # Lane-dense matmul layouts, built once (taps / channels on lanes).
        wa = jnp.transpose(w_analy[:, 0, :])                 # (K, C)
        Kp = self.R * self.S
        if Kp > self.K:
            wa = jnp.pad(wa, ((0, Kp - self.K), (0, 0)))     # zero taps past K
        self.w_analy_t = wa.astype(self.op_dtype)            # (R*S, C)
        self.w_syn = w_synth[:, 0, :].astype(self.op_dtype)  # (C, S)

    def __call__(self, x):
        if x.ndim == 2:
            x = x[:, None, :]                  # (B, 1, L)
        B, _, L = x.shape
        K, S, R = self.K, self.S, self.R

        # Cast before any padding/framing so XLA-side glue moves half the bytes.
        x = x.astype(self.op_dtype)

        # --- CUNet_helper padding (matches the PyTorch code exactly) ---
        res = K - L % K
        if res > 0:
            x = jnp.pad(x, ((0, 0), (0, 0), (0, res)))
        x = jnp.pad(x, ((0, 0), (0, 0), (S * 2, 0)))   # non-tracing branch
        Lp = x.shape[-1]
        sig = x[:, 0, :]

        T = (Lp - K) // S + 1                           # analysis frames
        rt = _choose_row_tile(T, B, self.max_tile)
        nt = -(-T // rt)
        Tpad = nt * rt

        # --- overlap-tiled chunk layout (no 3x im2col expansion) ---
        Lc = -(-Lp // S) * S
        if Lc > Lp:
            sig = jnp.pad(sig, ((0, 0), (0, Lc - Lp)))
        chunks = sig.reshape(B, Lc // S, S)              # (B, Tc, S)
        need = Tpad + R - 1
        if need > chunks.shape[1]:
            chunks = jnp.pad(chunks, ((0, 0), (0, need - chunks.shape[1]), (0, 0)))
        # tile i of batch b uses chunk rows [i*rt, i*rt + rt + R - 1): only
        # R-1 (=2) rows are duplicated per tile of rt rows.
        tiles = jnp.stack(
            [chunks[:, i * rt:i * rt + rt + R - 1, :] for i in range(nt)], axis=1)
        tiles = tiles.reshape(B * nt, rt + R - 1, S)

        # --- fused analysis + mask + synthesis (single Pallas kernel) ---
        segs = fused_analysis_mask_synthesis(
            tiles, self.w_analy_t, self.w_syn, rt, R, self.out_dtype)

        # kernel == stride => transpose-conv segments tile without overlap
        y = segs.reshape(B, Tpad, S)[:, :T, :].reshape(B, T * S)

        # PyTorch reference returns y[:, 0, :L] as-is.
        return y[:, :L].astype(jnp.float32)


# ------------------------- plain-JAX reference ----------------------------

def _reference(model, x):
    """f32 reference using the same (bf16-cast) weights/signal for a loose check."""
    B, L = x.shape
    K, S = model.K, model.S
    res = K - L % K
    xp = jnp.pad(x, ((0, 0), (0, res))) if res > 0 else x
    xp = jnp.pad(xp, ((0, 0), (S * 2, 0)))
    Lp = xp.shape[-1]
    T = (Lp - K) // S + 1
    idx = jnp.arange(T)[:, None] * S + jnp.arange(K)[None, :]
    frames = xp.astype(model.op_dtype).astype(jnp.float32)[:, idx]      # (B,T,K)
    wa = model.w_analy_t[:K].astype(jnp.float32)                        # (K,C)
    ws = model.w_syn.astype(jnp.float32)                                # (C,S)
    X = jnp.einsum('btk,kc->btc', frames, wa)
    Y = X * jax.nn.sigmoid(X)
    y = jnp.einsum('btc,cs->bts', Y, ws).reshape(B, T * S)
    return y[:, :L]


if __name__ == "__main__":
    key = jax.random.PRNGKey(0)
    B, L = 2, 1000
    x = jax.random.normal(key, (B, L), dtype=jnp.float32)

    model = CUNetHelperPallas(n_kernel=384, n_stride=128, n_dim=256, seed=0)
    y = jax.jit(model.__call__)(x)
    jax.block_until_ready(y)
    assert y.shape == (B, L) and y.dtype == jnp.float32

    y_ref = _reference(model, x)
    rel = jnp.linalg.norm(y - y_ref) / (jnp.linalg.norm(y_ref) + 1e-12)
    assert float(rel) < 2e-2, f"relative error too large: {float(rel)}"

    print("KERNEL_OK")
</pallas_src>

<mosaic_0001>
module attributes {stable_mosaic.version = 11 : i64} {
  func.func @_fused_kernel(%arg0: i32, %arg1: memref<1x18x128xbf16, #tpu.memory_space<vmem>>, %arg2: memref<384x256xbf16, #tpu.memory_space<vmem>>, %arg3: memref<256x128xbf16, #tpu.memory_space<vmem>>, %arg4: memref<1x16x128xf32, #tpu.memory_space<vmem>>) attributes {dimension_semantics = [#tpu.dimension_semantics<parallel>], iteration_bounds = array<i64: 2>, scalar_prefetch = 0 : i64, scratch_operands = 0 : i64, tpu.core_type = #tpu.core_type<tc>, window_params = [{transform_indices = @transform_0, window_bounds = array<i64: 1, 18, 128>}, {pipeline_mode = #tpu.pipeline_mode<synchronous>, transform_indices = @transform_1, window_bounds = array<i64: 384, 256>}, {pipeline_mode = #tpu.pipeline_mode<synchronous>, transform_indices = @transform_2, window_bounds = array<i64: 256, 128>}, {transform_indices = @transform_3, window_bounds = array<i64: 1, 16, 128>}]} {
    %c0 = arith.constant 0 : index
    %c0_0 = arith.constant 0 : index
    %c0_1 = arith.constant 0 : index
    %0 = vector.load %arg1[%c0, %c0_0, %c0_1] : memref<1x18x128xbf16, #tpu.memory_space<vmem>>, vector<1x18x128xbf16>
    %1 = vector.shape_cast %0 : vector<1x18x128xbf16> to vector<18x128xbf16>
    %2 = vector.extract_strided_slice %1 {offsets = [0, 0], sizes = [16, 128], strides = [1, 1]} : vector<18x128xbf16> to vector<16x128xbf16>
    %c0_2 = arith.constant 0 : index
    %c0_3 = arith.constant 0 : index
    %3 = vector.load %arg2[%c0_2, %c0_3] : memref<384x256xbf16, #tpu.memory_space<vmem>>, vector<128x256xbf16>
    %cst = arith.constant dense<0.000000e+00> : vector<16x256xf32>
    %4 = tpu.matmul %2, %3, %cst {dimension_numbers = #tpu.dot_dimension_numbers<[1], [0], [0], [1], [0, 0, 1, 1], [], []>} : vector<16x128xbf16>, vector<128x256xbf16>, vector<16x256xf32> -> vector<16x256xf32>
    %5 = vector.extract_strided_slice %1 {offsets = [1, 0], sizes = [16, 128], strides = [1, 1]} : vector<18x128xbf16> to vector<16x128xbf16>
    %c128 = arith.constant 128 : index
    %c0_4 = arith.constant 0 : index
    %6 = vector.load %arg2[%c128, %c0_4] : memref<384x256xbf16, #tpu.memory_space<vmem>>, vector<128x256xbf16>
    %cst_5 = arith.constant dense<0.000000e+00> : vector<16x256xf32>
    %7 = tpu.matmul %5, %6, %cst_5 {dimension_numbers = #tpu.dot_dimension_numbers<[1], [0], [0], [1], [0, 0, 1, 1], [], []>} : vector<16x128xbf16>, vector<128x256xbf16>, vector<16x256xf32> -> vector<16x256xf32>
    %8 = arith.addf %4, %7 : vector<16x256xf32>
    %9 = vector.extract_strided_slice %1 {offsets = [2, 0], sizes = [16, 128], strides = [1, 1]} : vector<18x128xbf16> to vector<16x128xbf16>
    %c256 = arith.constant 256 : index
    %c0_6 = arith.constant 0 : index
    %10 = vector.load %arg2[%c256, %c0_6] : memref<384x256xbf16, #tpu.memory_space<vmem>>, vector<128x256xbf16>
    %cst_7 = arith.constant dense<0.000000e+00> : vector<16x256xf32>
    %11 = tpu.matmul %9, %10, %cst_7 {dimension_numbers = #tpu.dot_dimension_numbers<[1], [0], [0], [1], [0, 0, 1, 1], [], []>} : vector<16x128xbf16>, vector<128x256xbf16>, vector<16x256xf32> -> vector<16x256xf32>
    %12 = arith.addf %8, %11 : vector<16x256xf32>
    %13 = arith.negf %12 : vector<16x256xf32>
    %14 = math.exp %13 : vector<16x256xf32>
    %cst_8 = arith.constant 1.000000e+00 : f32
    %15 = vector.broadcast %cst_8 : f32 to vector<16x256xf32>
    %16 = arith.addf %15, %14 : vector<16x256xf32>
    %17 = arith.divf %15, %16 : vector<16x256xf32>
    %18 = arith.mulf %12, %17 : vector<16x256xf32>
    %19 = arith.truncf %18 : vector<16x256xf32> to vector<16x256xbf16>
    %c0_9 = arith.constant 0 : index
    %c0_10 = arith.constant 0 : index
    %20 = vector.load %arg3[%c0_9, %c0_10] : memref<256x128xbf16, #tpu.memory_space<vmem>>, vector<256x128xbf16>
    %cst_11 = arith.constant dense<0.000000e+00> : vector<16x128xf32>
    %21 = tpu.matmul %19, %20, %cst_11 {dimension_numbers = #tpu.dot_dimension_numbers<[1], [0], [0], [1], [0, 0, 1, 1], [], []>} : vector<16x256xbf16>, vector<256x128xbf16>, vector<16x128xf32> -> vector<16x128xf32>
    %c0_12 = arith.constant 0 : index
    %c0_13 = arith.constant 0 : index
    %c0_14 = arith.constant 0 : index
    %22 = vector.load %arg4[%c0_12, %c0_13, %c0_14] : memref<1x16x128xf32, #tpu.memory_space<vmem>>, vector<1x16x128xf32>
    %23 = vector.shape_cast %22 : vector<1x16x128xf32> to vector<16x128xf32>
    %24 = vector.shape_cast %21 : vector<16x128xf32> to vector<1x16x128xf32>
    tpu.vector_store %arg4[%c0_12, %c0_13, %c0_14], %24 {strides = array<i32>} : memref<1x16x128xf32, #tpu.memory_space<vmem>>, vector<1x16x128xf32>,
    return
  }
  func.func @transform_0(%arg0: i32) -> (i32, i32, i32) {
    %c0_i32 = arith.constant 0 : i32
    %c0_i32_0 = arith.constant 0 : i32
    %c0_i32_1 = arith.constant 0 : i32
    return %arg0, %c0_i32, %c0_i32_0 : i32, i32, i32
  }
  func.func @transform_1(%arg0: i32) -> (i32, i32) {
    %c0_i32 = arith.constant 0 : i32
    %c0_i32_0 = arith.constant 0 : i32
    %c0_i32_1 = arith.constant 0 : i32
    return %c0_i32, %c0_i32_0 : i32, i32
  }
  func.func @transform_2(%arg0: i32) -> (i32, i32) {
    %c0_i32 = arith.constant 0 : i32
    %c0_i32_0 = arith.constant 0 : i32
    %c0_i32_1 = arith.constant 0 : i32
    return %c0_i32, %c0_i32_0 : i32, i32
  }
  func.func @transform_3(%arg0: i32) -> (i32, i32, i32) {
    %c0_i32 = arith.constant 0 : i32
    %c0_i32_0 = arith.constant 0 : i32
    %c0_i32_1 = arith.constant 0 : i32
    return %arg0, %c0_i32, %c0_i32_0 : i32, i32, i32
  }
}

</mosaic_0001>

<llo_original>
// kernel: squeeze.1
$region0: #{squeeze.1}
  %s0 = inlined_call_operand.vmem [shape: bf16[2,1,1408], index: 0, kind: input, shape index: {}]
  %s1 = inlined_call_operand.vmem [shape: bf16[2,11,128], index: 1, kind: output, shape index: {}]
  $region1: #{squeeze.1} parent=0
    #allocation0 [shape = 'u8[16384]{0}', space=vmem, size = 0x4000, scoped, tag = 'scoped mem for output reshape']
    #allocation1 [shape = 'u8[45056]{0}', space=vmem, size = 0xb000, scoped, tag = 'scoped mem for input reshape']
    %s3 = ssub.s32 4, 1
    %s4 = scalar_lea.vmem %s0, 10
    %s5 = sshrl.u32 %s3, 1
    %s6 = sor.u32 %s3, %s5
    %s7 = sand.u32 %s6, 85
    %s8 = sshrl.u32 %s7, 1
    %s9 = sor.u32 %s7, %s8
    %s10 = sand.u32 51, %s9
    %s11 = sshrl.u32 %s10, 2
    %s12 = sor.u32 %s10, %s11
    %s13 = sand.u32 15, %s12
    %v14 = vld [vmem:[%s4] sm:%s13]
    %v15 = vunpack.c.l.bf16 %v14
    %v16 = vunpack.c.h.bf16 %v14
    %s17 = scalar_lea.vmem [#allocation1], 80
    %18 = vst [vmem:[%s17] sm:%s3] %v15
    %s19 = scalar_lea.vmem %s0, 9
    %s20 = sshrl.u32 %s3, 1
    %s21 = sor.u32 %s3, %s20
    %s22 = sand.u32 %s21, 85
    %s23 = sshrl.u32 %s22, 1
    %s24 = sor.u32 %s22, %s23
    %s25 = sand.u32 51, %s24
    %s26 = sshrl.u32 %s25, 2
    %s27 = sor.u32 %s25, %s26
    %s28 = sand.u32 15, %s27
    %v29 = vld [vmem:[%s19] sm:%s28]
    %v30 = vunpack.c.l.bf16 %v29
    %v31 = vunpack.c.h.bf16 %v29
    %s32 = scalar_lea.vmem [#allocation1], 72
    %33 = vst [vmem:[%s32] sm:%s3] %v30
    %s34 = scalar_lea.vmem %s0, 8
    %s35 = sshrl.u32 %s3, 1
    %s36 = sor.u32 %s3, %s35
    %s37 = sand.u32 %s36, 85
    %s38 = sshrl.u32 %s37, 1
    %s39 = sor.u32 %s37, %s38
    %s40 = sand.u32 51, %s39
    %s41 = sshrl.u32 %s40, 2
    %s42 = sor.u32 %s40, %s41
    %s43 = sand.u32 15, %s42
    %v44 = vld [vmem:[%s34] sm:%s43]
    %v45 = vunpack.c.l.bf16 %v44
    %v46 = vunpack.c.h.bf16 %v44
    %s47 = scalar_lea.vmem [#allocation1], 64
    %48 = vst [vmem:[%s47] sm:%s3] %v45
    %s49 = scalar_lea.vmem %s0, 7
    %s50 = sshrl.u32 %s3, 1
    %s51 = sor.u32 %s3, %s50
    %s52 = sand.u32 %s51, 85
    %s53 = sshrl.u32 %s52, 1
    %s54 = sor.u32 %s52, %s53
    %s55 = sand.u32 51, %s54
    %s56 = sshrl.u32 %s55, 2
    %s57 = sor.u32 %s55, %s56
    %s58 = sand.u32 15, %s57
    %v59 = vld [vmem:[%s49] sm:%s58]
    %v60 = vunpack.c.l.bf16 %v59
    %v61 = vunpack.c.h.bf16 %v59
    %s62 = scalar_lea.vmem [#allocation1], 56
    %63 = vst [vmem:[%s62] sm:%s3] %v60
    %s64 = scalar_lea.vmem %s0, 6
    %s65 = sshrl.u32 %s3, 1
    %s66 = sor.u32 %s3, %s65
    %s67 = sand.u32 %s66, 85
    %s68 = sshrl.u32 %s67, 1
    %s69 = sor.u32 %s67, %s68
    %s70 = sand.u32 51, %s69
    %s71 = sshrl.u32 %s70, 2
    %s72 = sor.u32 %s70, %s71
    %s73 = sand.u32 15, %s72
    %v74 = vld [vmem:[%s64] sm:%s73]
    %v75 = vunpack.c.l.bf16 %v74
    %v76 = vunpack.c.h.bf16 %v74
    %s77 = scalar_lea.vmem [#allocation1], 48
    %78 = vst [vmem:[%s77] sm:%s3] %v75
    %s79 = scalar_lea.vmem %s0, 5
    %s80 = sshrl.u32 %s3, 1
    %s81 = sor.u32 %s3, %s80
    %s82 = sand.u32 %s81, 85
    %s83 = sshrl.u32 %s82, 1
    %s84 = sor.u32 %s82, %s83
    %s85 = sand.u32 51, %s84
    %s86 = sshrl.u32 %s85, 2
    %s87 = sor.u32 %s85, %s86
    %s88 = sand.u32 15, %s87
    %v89 = vld [vmem:[%s79] sm:%s88]
    %v90 = vunpack.c.l.bf16 %v89
    %v91 = vunpack.c.h.bf16 %v89
    %s92 = scalar_lea.vmem [#allocation1], 40
    %93 = vst [vmem:[%s92] sm:%s3] %v90
    %s94 = scalar_lea.vmem %s0, 4
    %s95 = sshrl.u32 %s3, 1
    %s96 = sor.u32 %s3, %s95
    %s97 = sand.u32 %s96, 85
    %s98 = sshrl.u32 %s97, 1
    %s99 = sor.u32 %s97, %s98
    %s100 = sand.u32 51, %s99
    %s101 = sshrl.u32 %s100, 2
    %s102 = sor.u32 %s100, %s101
    %s103 = sand.u32 15, %s102
    %v104 = vld [vmem:[%s94] sm:%s103]
    %v105 = vunpack.c.l.bf16 %v104
    %v106 = vunpack.c.h.bf16 %v104
    %s107 = scalar_lea.vmem [#allocation1], 32
    %108 = vst [vmem:[%s107] sm:%s3] %v105
    %s109 = scalar_lea.vmem %s0, 3
    %s110 = sshrl.u32 %s3, 1
    %s111 = sor.u32 %s3, %s110
    %s112 = sand.u32 %s111, 85
    %s113 = sshrl.u32 %s112, 1
    %s114 = sor.u32 %s112, %s113
    %s115 = sand.u32 51, %s114
    %s116 = sshrl.u32 %s115, 2
    %s117 = sor.u32 %s115, %s116
    %s118 = sand.u32 15, %s117
    %v119 = vld [vmem:[%s109] sm:%s118]
    %v120 = vunpack.c.l.bf16 %v119
    %v121 = vunpack.c.h.bf16 %v119
    %s122 = scalar_lea.vmem [#allocation1], 24
    %123 = vst [vmem:[%s122] sm:%s3] %v120
    %s124 = scalar_lea.vmem %s0, 2
    %s125 = sshrl.u32 %s3, 1
    %s126 = sor.u32 %s3, %s125
    %s127 = sand.u32 %s126, 85
    %s128 = sshrl.u32 %s127, 1
    %s129 = sor.u32 %s127, %s128
    %s130 = sand.u32 51, %s129
    %s131 = sshrl.u32 %s130, 2
    %s132 = sor.u32 %s130, %s131
    %s133 = sand.u32 15, %s132
    %v134 = vld [vmem:[%s124] sm:%s133]
    %v135 = vunpack.c.l.bf16 %v134
    %v136 = vunpack.c.h.bf16 %v134
    %s137 = scalar_lea.vmem [#allocation1], 16
    %138 = vst [vmem:[%s137] sm:%s3] %v135
    %s139 = scalar_lea.vmem %s0, 1
    %s140 = sshrl.u32 %s3, 1
    %s141 = sor.u32 %s3, %s140
    %s142 = sand.u32 %s141, 85
    %s143 = sshrl.u32 %s142, 1
    %s144 = sor.u32 %s142, %s143
    %s145 = sand.u32 51, %s144
    %s146 = sshrl.u32 %s145, 2
    %s147 = sor.u32 %s145, %s146
    %s148 = sand.u32 15, %s147
    %v149 = vld [vmem:[%s139] sm:%s148]
    %v150 = vunpack.c.l.bf16 %v149
    %v151 = vunpack.c.h.bf16 %v149
    %s152 = scalar_lea.vmem [#allocation1], 8
    %153 = vst [vmem:[%s152] sm:%s3] %v150
    %s154 = sshrl.u32 %s3, 1
    %s155 = sor.u32 %s3, %s154
    %s156 = sand.u32 %s155, 85
    %s157 = sshrl.u32 %s156, 1
    %s158 = sor.u32 %s156, %s157
    %s159 = sand.u32 51, %s158
    %s160 = sshrl.u32 %s159, 2
    %s161 = sor.u32 %s159, %s160
    %s162 = sand.u32 15, %s161
    %v163 = vld [vmem:[%s0] sm:%s162]
    %v164 = vunpack.c.l.bf16 %v163
    %v165 = vunpack.c.h.bf16 %v163
    %166 = vst [vmem:[#allocation1] sm:%s3] %v164
    %v167 = vld [vmem:[#allocation1] sm:$0x3]
    %168 = vst [vmem:[#allocation0] ss:$16 sm:$0x3] %v167
    %s169 = scalar_lea.vmem [#allocation1], 8
    %v170 = vld [vmem:[%s169] sm:$0x3]
    %s171 = scalar_lea.vmem [#allocation0], 1
    %172 = vst [vmem:[%s171] ss:$16 sm:$0x3] %v170
    %s173 = scalar_lea.vmem [#allocation1], 16
    %v174 = vld [vmem:[%s173] sm:$0x3]
    %s175 = scalar_lea.vmem [#allocation0], 2
    %176 = vst [vmem:[%s175] ss:$16 sm:$0x3] %v174
    %s177 = scalar_lea.vmem [#allocation1], 24
    %v178 = vld [vmem:[%s177] sm:$0x3]
    %s179 = scalar_lea.vmem [#allocation0], 3
    %180 = vst [vmem:[%s179] ss:$16 sm:$0x3] %v178
    %s181 = scalar_lea.vmem [#allocation1], 32
    %v182 = vld [vmem:[%s181] sm:$0x3]
    %s183 = scalar_lea.vmem [#allocation0], 4
    %184 = vst [vmem:[%s183] ss:$16 sm:$0x3] %v182
    %s185 = scalar_lea.vmem [#allocation1], 40
    %v186 = vld [vmem:[%s185] sm:$0x3]
    %s187 = scalar_lea.vmem [#allocation0], 5
    %188 = vst [vmem:[%s187] ss:$16 sm:$0x3] %v186
    %s189 = scalar_lea.vmem [#allocation1], 48
    %v190 = vld [vmem:[%s189] sm:$0x3]
    %s191 = scalar_lea.vmem [#allocation0], 6
    %192 = vst [vmem:[%s191] ss:$16 sm:$0x3] %v190
    %s193 = scalar_lea.vmem [#allocation1], 56
    %v194 = vld [vmem:[%s193] sm:$0x3]
    %s195 = scalar_lea.vmem [#allocation0], 7
    %196 = vst [vmem:[%s195] ss:$16 sm:$0x3] %v194
    %s197 = scalar_lea.vmem [#allocation1], 64
    %v198 = vld [vmem:[%s197] sm:$0x3]
    %s199 = scalar_lea.vmem [#allocation0], 8
    %200 = vst [vmem:[%s199] ss:$16 sm:$0x3] %v198
    %s201 = scalar_lea.vmem [#allocation1], 72
    %v202 = vld [vmem:[%s201] sm:$0x3]
    %s203 = scalar_lea.vmem [#allocation0], 9
    %204 = vst [vmem:[%s203] ss:$16 sm:$0x3] %v202
    %s205 = scalar_lea.vmem [#allocation1], 80
    %v206 = vld [vmem:[%s205] sm:$0x3]
    %s207 = scalar_lea.vmem [#allocation0], 10
    %208 = vst [vmem:[%s207] ss:$16 sm:$0x3] %v206
    %s210 = ssub.s32 256, 1
    %v211 = vld [vmem:[#allocation0] sm:%s210]
    %v212 = vpack.c.bf16 0.0, %v211
    %s214 = ssub.s32 16, 1
    %215 = vst [vmem:[%s1] sm:%s214] %v212
    %s216 = scalar_lea.vmem [#allocation0], 8
    %v217 = vld [vmem:[%s216] sm:%s210]
    %v218 = vpack.c.bf16 0.0, %v217
    %s220 = ssub.s32 16, 1
    %s221 = scalar_lea.vmem %s1, 4
    %222 = vst [vmem:[%s221] sm:%s220] %v218
    %s223 = scalar_lea.vmem [#allocation0], 16
    %v224 = vld [vmem:[%s223] sm:%s210]
    %v225 = vpack.c.bf16 0.0, %v224
    %s227 = ssub.s32 16, 1
    %s228 = scalar_lea.vmem %s1, 8
    %229 = vst [vmem:[%s228] sm:%s227] %v225
    %s230 = scalar_lea.vmem [#allocation0], 24
    %v231 = vld [vmem:[%s230] sm:%s210]
    %v232 = vpack.c.bf16 0.0, %v231
    %s234 = ssub.s32 16, 1
    %s235 = scalar_lea.vmem %s1, 12
    %236 = vst [vmem:[%s235] sm:%s234] %v232

// kernel: a_call__.1
$region0: #{a_call__.1}
  #allocation0 [shape = 'u32[]', space=smem, size = 0x4, offset = 0x4, fixed_abs, tag = 'smem constant byte address 0x4 - core index']
  #allocation1 [shape = 'u32[72,128]{1,0:T(1,128)}', space=vmem, size = 0x9000, scoped, tag = 'internal scratch']
  %s0 = inlined_call_operand.vmem [shape: bf16[2,18,128], index: 0, kind: input, shape index: {}]
  %s1 = inlined_call_operand.hbm [shape: bf16[384,256], index: 1, kind: input, shape index: {}]
  %s2 = inlined_call_operand.hbm [shape: bf16[256,128], index: 2, kind: input, shape index: {}]
  %s3 = inlined_call_operand.vmem [shape: f32[2,16,128], index: 3, kind: output, shape index: {}]
  %s4 = sld [smem:[#allocation0]]
  $region53: #{a_call__.1} parent=0
    _
  %s6 = ssub.s32 1, %s4
  %s7 = scalar_select 0, %s6, %s4
  $region1: #{a_call__.1} parent=0
    #allocation2 [shape = 'u8[196608]{0}', space=vmem, size = 0x30000, scoped, tag = 'input window, operand 1, single buffered']
    #allocation3 [shape = 's32[2]{0}', space=sflag, size = 0x8, scoped, tag = 'scoped memory for a_call__.1']
    #allocation4 [shape = 'u8[65536]{0}', space=vmem, size = 0x10000, scoped, tag = 'input window, operand 2, single buffered']
    #allocation5 [shape = 's32[1]{0}', space=sflag, size = 0x4, scoped, tag = 'scoped memory for a_call__.1']
    %8 = vsyncpa [#allocation3], 0
    %9 = vsyncpa [#allocation5], 0
    loop: start=0, step=1, limit=4
    $region2: #{a_call__.1} parent=1 // loop_pre_header
      _
    $region3: #{a_call__.1} parent=1 // loop_header
      %s11 = sphi 0, %s15
      %p12 = scmp.ge.s32.totalorder %s11, 4
      %s21 = sphi 0, %s23
      %s24 = sphi 0, %s21
      %s25 = sphi 0, %s24
      %s41 = sphi 0, %s25
      %s45 = sphi 0, %s45
      %s47 = sphi 0, %s45
      %s48 = sphi 0, %s47
      %s62 = sphi 0, %s48
      %s66 = sphi 0, %s66
      %s68 = sphi 0, %s66
      %s69 = sphi 0, %s68
      %s83 = sphi 0, %s69
      %s89 = sphi 0, %s91
      %s92 = sphi 0, %s89
      %s93 = sphi 0, %s92
      %s109 = sphi 0, %s93
    $region4: #{a_call__.1} parent=1 // loop_header_branch
      %14 = sbr.rel (%p12) target = $region8
    $region5: #{a_call__.1} parent=1 // loop_body
      %s16 = ssub.s32 %s11, 1
      %s17 = ssub.s32 %s11, 2
      %s18 = sadd.s32 %s11, 1
      %s19 = ssub.s32 %s11, %s18
      %p20 = scmp.eq.s32.totalorder %s19, 0
      %s22 = sadd.s32 %s21, 1
      %s23 = scalar_select %p20, %s21, %s22
      %p26 = pneg %p20
      %p27 = scmp.eq.s32.totalorder %s11, 1
      %p28 = por %p26, %p27
      %p29 = scmp.ne.s32.totalorder %s21, %s24
      %p30 = scmp.eq.s32.totalorder %s11, 0
      %p31 = por %p29, %p30
      %p32 = scmp.ne.s32.totalorder %s21, %s24
      %p33 = scmp.eq.s32.totalorder %s16, 1
      %p34 = por %p32, %p33
      %p35 = scmp.ne.s32.totalorder %s24, %s25
      %p36 = scmp.eq.s32.totalorder %s16, 0
      %p37 = por %p35, %p36
      %p38 = scmp.ne.s32.totalorder %s24, %s25
      %p39 = scmp.eq.s32.totalorder %s17, 1
      %p40 = por %p38, %p39
      %p42 = scmp.ne.s32.totalorder %s25, %s41
      %p43 = scmp.eq.s32.totalorder %s17, 0
      %p44 = por %p42, %p43
      %s46 = sadd.s32 %s45, 1
      %p49 = scmp.eq.s32.totalorder %s11, 1
      %p50 = scmp.ne.s32.totalorder %s45, %s47
      %p51 = scmp.eq.s32.totalorder %s11, 0
      %p52 = por %p50, %p51
      %p53 = scmp.ne.s32.totalorder %s45, %s47
      %p54 = scmp.eq.s32.totalorder %s16, 1
      %p55 = por %p53, %p54
      %p56 = scmp.ne.s32.totalorder %s47, %s48
      %p57 = scmp.eq.s32.totalorder %s16, 0
      %p58 = por %p56, %p57
      %p59 = scmp.ne.s32.totalorder %s47, %s48
      %p60 = scmp.eq.s32.totalorder %s17, 1
      %p61 = por %p59, %p60
      %p63 = scmp.ne.s32.totalorder %s48, %s62
      %p64 = scmp.eq.s32.totalorder %s17, 0
      %p65 = por %p63, %p64
      %s67 = sadd.s32 %s66, 1
      %p70 = scmp.eq.s32.totalorder %s11, 1
      %p71 = scmp.ne.s32.totalorder %s66, %s68
      %p72 = scmp.eq.s32.totalorder %s11, 0
      %p73 = por %p71, %p72
      %p74 = scmp.ne.s32.totalorder %s66, %s68
      %p75 = scmp.eq.s32.totalorder %s16, 1
      %p76 = por %p74, %p75
      %p77 = scmp.ne.s32.totalorder %s68, %s69
      %p78 = scmp.eq.s32.totalorder %s16, 0
      %p79 = por %p77, %p78
      %p80 = scmp.ne.s32.totalorder %s68, %s69
      %p81 = scmp.eq.s32.totalorder %s17, 1
      %p82 = por %p80, %p81
      %p84 = scmp.ne.s32.totalorder %s69, %s83
      %p85 = scmp.eq.s32.totalorder %s17, 0
      %p86 = por %p84, %p85
      %s87 = ssub.s32 %s11, %s18
      %p88 = scmp.eq.s32.totalorder %s87, 0
      %s90 = sadd.s32 %s89, 1
      %s91 = scalar_select %p88, %s89, %s90
      %p94 = pneg %p88
      %p95 = scmp.eq.s32.totalorder %s11, 1
      %p96 = por %p94, %p95
      %p97 = scmp.ne.s32.totalorder %s89, %s92
      %p98 = scmp.eq.s32.totalorder %s11, 0
      %p99 = por %p97, %p98
      %p100 = scmp.ne.s32.totalorder %s89, %s92
      %p101 = scmp.eq.s32.totalorder %s16, 1
      %p102 = por %p100, %p101
      %p103 = scmp.ne.s32.totalorder %s92, %s93
      %p104 = scmp.eq.s32.totalorder %s16, 0
      %p105 = por %p103, %p104
      %p106 = scmp.ne.s32.totalorder %s92, %s93
      %p107 = scmp.eq.s32.totalorder %s17, 1
      %p108 = por %p106, %p107
      %p110 = scmp.ne.s32.totalorder %s93, %s109
      %p111 = scmp.eq.s32.totalorder %s17, 0
      %p112 = por %p110, %p111
      %p113 = scmp.le.s32.totalorder 1, %s11
      %p114 = scmp.lt.s32.totalorder %s11, 3
      %p115 = pnand %p113, %p114
      %p116 = pneg %p115
      // Predicated region
      $region9: #{a_call__.1} parent=5 // pred_check
        _
      $region10: #{a_call__.1} parent=5 // pred_check_branch
        %118 = sbr.rel (%p115) target = $region12
      $region11: #{a_call__.1} parent=5 // pred_region
        %s119 = ssub.s32 %s11, 1
        // Predicated region
        $region13: #{a_call__.1} parent=11 // pred_check
          %p120 = pneg %p58
        $region14: #{a_call__.1} parent=11 // pred_check_branch
          %122 = sbr.rel (%p120) target = $region16
        $region15: #{a_call__.1} parent=11 // pred_region
          %124 = vsyncadd [#allocation3], 0
          %s125 = sshll.u32 %s1, 4
          %s126 = int_to_ptr.hbm [resolvable:$true] %s125
          %s127 = sshll.u32 [#allocation2], 4
          %s128 = int_to_ptr.vmem [resolvable:$true] %s127
          %133 = dma.hbm_to_vmem [thread:$0]  %s126, 6144, %s128, [#allocation3], 128, 128, 8
        $region16: #{a_call__.1} parent=11 // pred_fallthru
          _
        // Predicated region
        $region17: #{a_call__.1} parent=11 // pred_check
          %p134 = pneg %p79
        $region18: #{a_call__.1} parent=11 // pred_check_branch
          %136 = sbr.rel (%p134) target = $region20
        $region19: #{a_call__.1} parent=11 // pred_region
          %138 = vsyncadd [#allocation5], 0
          %s139 = sshll.u32 %s2, 4
          %s140 = int_to_ptr.hbm [resolvable:$true] %s139
          %s141 = sshll.u32 [#allocation4], 4
          %s142 = int_to_ptr.vmem [resolvable:$true] %s141
          %147 = dma.hbm_to_vmem [thread:$0]  %s140, 2048, %s142, [#allocation5], 64, 64, 4
        $region20: #{a_call__.1} parent=11 // pred_fallthru
          _
      $region12: #{a_call__.1} parent=5 // pred_fallthru
        _
      %p148 = scmp.lt.s32.totalorder %s11, 2
      // Predicated region
      $region21: #{a_call__.1} parent=5 // pred_check
        %p149 = pneg %p148
      $region22: #{a_call__.1} parent=5 // pred_check_branch
        %151 = sbr.rel (%p149) target = $region24
      $region23: #{a_call__.1} parent=5 // pred_region
        // Predicated region
        $region25: #{a_call__.1} parent=23 // pred_check
          %p152 = pneg %p31
        $region26: #{a_call__.1} parent=23 // pred_check_branch
          %154 = sbr.rel (%p152) target = $region28
        $region27: #{a_call__.1} parent=23 // pred_region
          %p155 = scmp.lt.s32.totalorder %s11, 1
          %s156 = scalar_select %p155, %s11, 1
          %s157 = smul.addr %s156, 3
          %s158 = smul.addr %s157, 4
          %s159 = scalar_lea.vmem %s0, %s158
        $region28: #{a_call__.1} parent=23 // pred_fallthru
          _
      $region24: #{a_call__.1} parent=5 // pred_fallthru
        _
      %p160 = scmp.le.s32.totalorder 1, %s11
      %p161 = scmp.lt.s32.totalorder %s11, 3
      %p162 = pnand %p160, %p161
      %p163 = pneg %p162
      // Predicated region
      $region29: #{a_call__.1} parent=5 // pred_check
        _
      $region30: #{a_call__.1} parent=5 // pred_check_branch
        %165 = sbr.rel (%p162) target = $region32
      $region31: #{a_call__.1} parent=5 // pred_region
        %s166 = ssub.s32 %s11, 1
        // Predicated region
        $region33: #{a_call__.1} parent=31 // pred_check
          %p167 = pneg %p58
        $region34: #{a_call__.1} parent=31 // pred_check_branch
          %169 = sbr.rel (%p167) target = $region36
        $region35: #{a_call__.1} parent=31 // pred_region
          %171 = dma.done [#allocation3], 6144
        $region36: #{a_call__.1} parent=31 // pred_fallthru
          _
        // Predicated region
        $region37: #{a_call__.1} parent=31 // pred_check
          %p172 = pneg %p79
        $region38: #{a_call__.1} parent=31 // pred_check_branch
          %174 = sbr.rel (%p172) target = $region40
        $region39: #{a_call__.1} parent=31 // pred_region
          %176 = dma.done [#allocation5], 2048
        $region40: #{a_call__.1} parent=31 // pred_fallthru
          _
        %p177 = scmp.lt.s32.totalorder %s16, 1
        %s178 = scalar_select %p177, %s16, 1
        %s179 = smul.addr %s178, 3
        %s180 = smul.addr %s179, 4
        %s181 = scalar_lea.vmem %s0, %s180
        %p182 = pneg %p37
        %p183 = pneg %p34
        %p184 = pneg %p58
        %p185 = pneg %p55
        %p186 = pneg %p79
        %p187 = pneg %p76
        %p188 = pneg %p105
        %p189 = pneg %p102
        %p190 = scmp.lt.s32.totalorder %s16, 1
        %s191 = scalar_select %p190, %s16, 1
        %s192 = smul.addr %s191, 2
        %s193 = smul.addr %s192, 8
        %s194 = scalar_lea.vmem %s3, %s193
        %p195 = scmp.lt.s32.totalorder %s16, 1
        %s196 = scalar_select %p195, %s16, 1
        %s197 = smul.addr %s196, 3
        %s198 = smul.addr %s197, 4
        %s199 = scalar_lea.vmem %s0, %s198
        %p200 = scmp.lt.s32.totalorder %s16, 1
        %s201 = scalar_select %p200, %s16, 1
        %s202 = smul.addr %s201, 2
        %s203 = smul.addr %s202, 8
        %s204 = scalar_lea.vmem %s3, %s203
        %v205 = vld [vmem:[%s199] sm:$0xf]
        %v206 = vld [vmem:[%s199 + $0x4] sm:$0xf]
        %v207 = vld [vmem:[%s199 + $0x8] sm:$0x1]
        %v208 = vld [vmem:[#allocation2] sm:$0xff]
        %v209 = vld [vmem:[#allocation2 + $0x8] sm:$0xff]
        %v210 = vld [vmem:[#allocation2 + $0x10] sm:$0xff]
        %v211 = vld [vmem:[#allocation2 + $0x18] sm:$0xff]
        %v212 = vld [vmem:[#allocation2 + $0x20] sm:$0xff]
        %v213 = vld [vmem:[#allocation2 + $0x28] sm:$0xff]
        %v214 = vld [vmem:[#allocation2 + $0x30] sm:$0xff]
        %v215 = vld [vmem:[#allocation2 + $0x38] sm:$0xff]
        %v216 = vld [vmem:[#allocation2 + $0x40] sm:$0xff]
        %v217 = vld [vmem:[#allocation2 + $0x48] sm:$0xff]
        %v218 = vld [vmem:[#allocation2 + $0x50] sm:$0xff]
        %v219 = vld [vmem:[#allocation2 + $0x58] sm:$0xff]
        %v220 = vld [vmem:[#allocation2 + $0x60] sm:$0xff]
        %v221 = vld [vmem:[#allocation2 + $0x68] sm:$0xff]
        %v222 = vld [vmem:[#allocation2 + $0x70] sm:$0xff]
        %v223 = vld [vmem:[#allocation2 + $0x78] sm:$0xff]
        %v224 = vld [vmem:[#allocation2 + $0x80] sm:$0xff]
        %v225 = vld [vmem:[#allocation2 + $0x88] sm:$0xff]
        %v226 = vld [vmem:[#allocation2 + $0x90] sm:$0xff]
        %v227 = vld [vmem:[#allocation2 + $0x98] sm:$0xff]
        %v228 = vld [vmem:[#allocation2 + $0xa0] sm:$0xff]
        %v229 = vld [vmem:[#allocation2 + $0xa8] sm:$0xff]
        %v230 = vld [vmem:[#allocation2 + $0xb0] sm:$0xff]
        %v231 = vld [vmem:[#allocation2 + $0xb8] sm:$0xff]
        %v232 = vld [vmem:[#allocation2 + $0xc0] sm:$0xff]
        %v233 = vld [vmem:[#allocation2 + $0xc8] sm:$0xff]
        %v234 = vld [vmem:[#allocation2 + $0xd0] sm:$0xff]
        %v235 = vld [vmem:[#allocation2 + $0xd8] sm:$0xff]
        %v236 = vld [vmem:[#allocation2 + $0xe0] sm:$0xff]
        %v237 = vld [vmem:[#allocation2 + $0xe8] sm:$0xff]
        %v238 = vld [vmem:[#allocation2 + $0xf0] sm:$0xff]
        %v239 = vld [vmem:[#allocation2 + $0xf8] sm:$0xff]
        %v243 = vunpack.c.l.b16 %v205
        %v244 = vunpack.c.l.b16 %v206
        %v245 = vunpack.c.l.b16 %v207
        %v246 = vpack.c.b16 %v244, %v243
        %v247 = vpack.c.b16 %v245, %v245
        %vm248 = vsmask.f32 7424
        %v250 = vshrl.u32 %v246, 16
        %v252 = vshll.u32 %v246, 16
        %v254 = vrot.slane %v252, 1
        %v255 = vor.u32 %v250, %v254
        %v257 = vshll.u32 %v247, 16
        %v259 = vrot.slane %v257, 1
        %v260 = vsel %vm248, %v255, %v259
        %v278 = vunpack.c.l.b16 %v224
        %v279 = vunpack.c.h.b16 %v224
        %v280 = vunpack.c.l.b16 %v225
        %v281 = vunpack.c.h.b16 %v225
        %v282 = vunpack.c.l.b16 %v226
        %v283 = vunpack.c.h.b16 %v226
        %v284 = vunpack.c.l.b16 %v227
        %v285 = vunpack.c.h.b16 %v227
        %v286 = vunpack.c.l.b16 %v228
        %v287 = vunpack.c.h.b16 %v228
        %v288 = vunpack.c.l.b16 %v229
        %v289 = vunpack.c.h.b16 %v229
        %v290 = vunpack.c.l.b16 %v230
        %v291 = vunpack.c.h.b16 %v230
        %v292 = vunpack.c.l.b16 %v231
        %v293 = vunpack.c.h.b16 %v231
        %v294 = vunpack.c.l.b16 %v232
        %v295 = vunpack.c.h.b16 %v232
        %v296 = vunpack.c.l.b16 %v233
        %v297 = vunpack.c.h.b16 %v233
        %v298 = vunpack.c.l.b16 %v234
        %v299 = vunpack.c.h.b16 %v234
        %v300 = vunpack.c.l.b16 %v235
        %v301 = vunpack.c.h.b16 %v235
        %v302 = vunpack.c.l.b16 %v236
        %v303 = vunpack.c.h.b16 %v236
        %v304 = vunpack.c.l.b16 %v237
        %v305 = vunpack.c.h.b16 %v237
        %v306 = vunpack.c.l.b16 %v238
        %v307 = vunpack.c.h.b16 %v238
        %v308 = vunpack.c.l.b16 %v239
        %v309 = vunpack.c.h.b16 %v239
        %v310 = vpack.c.b16 %v280, %v278
        %v311 = vpack.c.b16 %v281, %v279
        %v312 = vpack.c.b16 %v284, %v282
        %v313 = vpack.c.b16 %v285, %v283
        %v314 = vpack.c.b16 %v288, %v286
        %v315 = vpack.c.b16 %v289, %v287
        %v316 = vpack.c.b16 %v292, %v290
        %v317 = vpack.c.b16 %v293, %v291
        %v318 = vpack.c.b16 %v296, %v294
        %v319 = vpack.c.b16 %v297, %v295
        %v320 = vpack.c.b16 %v300, %v298
        %v321 = vpack.c.b16 %v301, %v299
        %v322 = vpack.c.b16 %v304, %v302
        %v323 = vpack.c.b16 %v305, %v303
        %v324 = vpack.c.b16 %v308, %v306
        %v325 = vpack.c.b16 %v309, %v307
        %342 = vmatpush.bf16.msra.mxu0 %v324
        %343 = vmatpush.bf16.msra.mxu0 %v322
        %344 = vmatpush.bf16.msra.mxu0 %v320
        %345 = vmatpush.bf16.msra.mxu0 %v318
        %346 = vmatpush.bf16.msra.mxu0 %v316
        %347 = vmatpush.bf16.msra.mxu0 %v314
        %348 = vmatpush.bf16.msra.mxu0 %v312
        %349 = vmatpush.bf16.msra.mxu0 %v310
        %350 = vmatmul.bf16.gmra.mxu0 %v260
        %v351 = vpop.f32.mrf.mxu0
        %v352 = vadd.f32 0.0, %v351
        %v353 = vpop.f32.mrf.mxu0
        %v354 = vadd.f32 0.0, %v353
        %355 = vdwg.mxu0
        %356 = vmatpush.bf16.msra.mxu0 %v325
        %357 = vmatpush.bf16.msra.mxu0 %v323
        %358 = vmatpush.bf16.msra.mxu0 %v321
        %359 = vmatpush.bf16.msra.mxu0 %v319
        %360 = vmatpush.bf16.msra.mxu0 %v317
        %361 = vmatpush.bf16.msra.mxu0 %v315
        %362 = vmatpush.bf16.msra.mxu0 %v313
        %363 = vmatpush.bf16.msra.mxu0 %v311
        %364 = vmatmul.bf16.gmra.mxu0 %v260
        %v365 = vpop.f32.mrf.mxu0
        %v366 = vadd.f32 0.0, %v365
        %v367 = vpop.f32.mrf.mxu0
        %v368 = vadd.f32 0.0, %v367
        %369 = vdwg.mxu0
        %v387 = vunpack.c.l.b16 %v208
        %v388 = vunpack.c.h.b16 %v208
        %v389 = vunpack.c.l.b16 %v209
        %v390 = vunpack.c.h.b16 %v209
        %v391 = vunpack.c.l.b16 %v210
        %v392 = vunpack.c.h.b16 %v210
        %v393 = vunpack.c.l.b16 %v211
        %v394 = vunpack.c.h.b16 %v211
        %v395 = vunpack.c.l.b16 %v212
        %v396 = vunpack.c.h.b16 %v212
        %v397 = vunpack.c.l.b16 %v213
        %v398 = vunpack.c.h.b16 %v213
        %v399 = vunpack.c.l.b16 %v214
        %v400 = vunpack.c.h.b16 %v214
        %v401 = vunpack.c.l.b16 %v215
        %v402 = vunpack.c.h.b16 %v215
        %v403 = vunpack.c.l.b16 %v216
        %v404 = vunpack.c.h.b16 %v216
        %v405 = vunpack.c.l.b16 %v217
        %v406 = vunpack.c.h.b16 %v217
        %v407 = vunpack.c.l.b16 %v218
        %v408 = vunpack.c.h.b16 %v218
        %v409 = vunpack.c.l.b16 %v219
        %v410 = vunpack.c.h.b16 %v219
        %v411 = vunpack.c.l.b16 %v220
        %v412 = vunpack.c.h.b16 %v220
        %v413 = vunpack.c.l.b16 %v221
        %v414 = vunpack.c.h.b16 %v221
        %v415 = vunpack.c.l.b16 %v222
        %v416 = vunpack.c.h.b16 %v222
        %v417 = vunpack.c.l.b16 %v223
        %v418 = vunpack.c.h.b16 %v223
        %v419 = vpack.c.b16 %v389, %v387
        %v420 = vpack.c.b16 %v390, %v388
        %v421 = vpack.c.b16 %v393, %v391
        %v422 = vpack.c.b16 %v394, %v392
        %v423 = vpack.c.b16 %v397, %v395
        %v424 = vpack.c.b16 %v398, %v396
        %v425 = vpack.c.b16 %v401, %v399
        %v426 = vpack.c.b16 %v402, %v400
        %v427 = vpack.c.b16 %v405, %v403
        %v428 = vpack.c.b16 %v406, %v404
        %v429 = vpack.c.b16 %v409, %v407
        %v430 = vpack.c.b16 %v410, %v408
        %v431 = vpack.c.b16 %v413, %v411
        %v432 = vpack.c.b16 %v414, %v412
        %v433 = vpack.c.b16 %v417, %v415
        %v434 = vpack.c.b16 %v418, %v416
        %451 = vmatpush.bf16.msra.mxu0 %v433
        %452 = vmatpush.bf16.msra.mxu0 %v431
        %453 = vmatpush.bf16.msra.mxu0 %v429
        %454 = vmatpush.bf16.msra.mxu0 %v427
        %455 = vmatpush.bf16.msra.mxu0 %v425
        %456 = vmatpush.bf16.msra.mxu0 %v423
        %457 = vmatpush.bf16.msra.mxu0 %v421
        %458 = vmatpush.bf16.msra.mxu0 %v419
        %459 = vmatmul.bf16.gmra.mxu0 %v246
        %v460 = vpop.f32.mrf.mxu0
        %v461 = vadd.f32 %v352, %v460
        %v462 = vpop.f32.mrf.mxu0
        %v463 = vadd.f32 %v354, %v462
        %464 = vdwg.mxu0
        %465 = vmatpush.bf16.msra.mxu0 %v434
        %466 = vmatpush.bf16.msra.mxu0 %v432
        %467 = vmatpush.bf16.msra.mxu0 %v430
        %468 = vmatpush.bf16.msra.mxu0 %v428
        %469 = vmatpush.bf16.msra.mxu0 %v426
        %470 = vmatpush.bf16.msra.mxu0 %v424
        %471 = vmatpush.bf16.msra.mxu0 %v422
        %472 = vmatpush.bf16.msra.mxu0 %v420
        %473 = vmatmul.bf16.gmra.mxu0 %v246
        %v474 = vpop.f32.mrf.mxu0
        %v475 = vadd.f32 %v366, %v474
        %v476 = vpop.f32.mrf.mxu0
        %v477 = vadd.f32 %v368, %v476
        %478 = vdwg.mxu0
        %v479 = vld [vmem:[#allocation2 + $0x100] sm:$0xff]
        %v480 = vld [vmem:[#allocation2 + $0x108] sm:$0xff]
        %v481 = vld [vmem:[#allocation2 + $0x110] sm:$0xff]
        %v482 = vld [vmem:[#allocation2 + $0x118] sm:$0xff]
        %v483 = vld [vmem:[#allocation2 + $0x120] sm:$0xff]
        %v484 = vld [vmem:[#allocation2 + $0x128] sm:$0xff]
        %v485 = vld [vmem:[#allocation2 + $0x130] sm:$0xff]
        %v486 = vld [vmem:[#allocation2 + $0x138] sm:$0xff]
        %v487 = vld [vmem:[#allocation2 + $0x140] sm:$0xff]
        %v488 = vld [vmem:[#allocation2 + $0x148] sm:$0xff]
        %v489 = vld [vmem:[#allocation2 + $0x150] sm:$0xff]
        %v490 = vld [vmem:[#allocation2 + $0x158] sm:$0xff]
        %v491 = vld [vmem:[#allocation2 + $0x160] sm:$0xff]
        %v492 = vld [vmem:[#allocation2 + $0x168] sm:$0xff]
        %v493 = vld [vmem:[#allocation2 + $0x170] sm:$0xff]
        %v494 = vld [vmem:[#allocation2 + $0x178] sm:$0xff]
        %vm495 = vcmask 1046528
        %v496 = vrot.slane %v246, 1
        %v497 = vrot.slane %v247, 1
        %v498 = vsel %vm495, %v496, %v497
        %v516 = vunpack.c.l.b16 %v479
        %v517 = vunpack.c.h.b16 %v479
        %v518 = vunpack.c.l.b16 %v480
        %v519 = vunpack.c.h.b16 %v480
        %v520 = vunpack.c.l.b16 %v481
        %v521 = vunpack.c.h.b16 %v481
        %v522 = vunpack.c.l.b16 %v482
        %v523 = vunpack.c.h.b16 %v482
        %v524 = vunpack.c.l.b16 %v483
        %v525 = vunpack.c.h.b16 %v483
        %v526 = vunpack.c.l.b16 %v484
        %v527 = vunpack.c.h.b16 %v484
        %v528 = vunpack.c.l.b16 %v485
        %v529 = vunpack.c.h.b16 %v485
        %v530 = vunpack.c.l.b16 %v486
        %v531 = vunpack.c.h.b16 %v486
        %v532 = vunpack.c.l.b16 %v487
        %v533 = vunpack.c.h.b16 %v487
        %v534 = vunpack.c.l.b16 %v488
        %v535 = vunpack.c.h.b16 %v488
        %v536 = vunpack.c.l.b16 %v489
        %v537 = vunpack.c.h.b16 %v489
        %v538 = vunpack.c.l.b16 %v490
        %v539 = vunpack.c.h.b16 %v490
        %v540 = vunpack.c.l.b16 %v491
        %v541 = vunpack.c.h.b16 %v491
        %v542 = vunpack.c.l.b16 %v492
        %v543 = vunpack.c.h.b16 %v492
        %v544 = vunpack.c.l.b16 %v493
        %v545 = vunpack.c.h.b16 %v493
        %v546 = vunpack.c.l.b16 %v494
        %v547 = vunpack.c.h.b16 %v494
        %v548 = vpack.c.b16 %v518, %v516
        %v549 = vpack.c.b16 %v519, %v517
        %v550 = vpack.c.b16 %v522, %v520
        %v551 = vpack.c.b16 %v523, %v521
        %v552 = vpack.c.b16 %v526, %v524
        %v553 = vpack.c.b16 %v527, %v525
        %v554 = vpack.c.b16 %v530, %v528
        %v555 = vpack.c.b16 %v531, %v529
        %v556 = vpack.c.b16 %v534, %v532
        %v557 = vpack.c.b16 %v535, %v533
        %v558 = vpack.c.b16 %v538, %v536
        %v559 = vpack.c.b16 %v539, %v537
        %v560 = vpack.c.b16 %v542, %v540
        %v561 = vpack.c.b16 %v543, %v541
        %v562 = vpack.c.b16 %v546, %v544
        %v563 = vpack.c.b16 %v547, %v545
        %580 = vmatpush.bf16.msra.mxu0 %v562
        %581 = vmatpush.bf16.msra.mxu0 %v560
        %582 = vmatpush.bf16.msra.mxu0 %v558
        %583 = vmatpush.bf16.msra.mxu0 %v556
        %584 = vmatpush.bf16.msra.mxu0 %v554
        %585 = vmatpush.bf16.msra.mxu0 %v552
        %586 = vmatpush.bf16.msra.mxu0 %v550
        %587 = vmatpush.bf16.msra.mxu0 %v548
        %588 = vmatmul.bf16.gmra.mxu0 %v498
        %v589 = vpop.f32.mrf.mxu0
        %v590 = vadd.f32 0.0, %v589
        %v591 = vpop.f32.mrf.mxu0
        %v592 = vadd.f32 0.0, %v591
        %593 = vdwg.mxu0
        %594 = vmatpush.bf16.msra.mxu0 %v563
        %595 = vmatpush.bf16.msra.mxu0 %v561
        %596 = vmatpush.bf16.msra.mxu0 %v559
        %597 = vmatpush.bf16.msra.mxu0 %v557
        %598 = vmatpush.bf16.msra.mxu0 %v555
        %599 = vmatpush.bf16.msra.mxu0 %v553
        %600 = vmatpush.bf16.msra.mxu0 %v551
        %601 = vmatpush.bf16.msra.mxu0 %v549
        %602 = vmatmul.bf16.gmra.mxu0 %v498
        %v603 = vpop.f32.mrf.mxu0
        %v604 = vadd.f32 0.0, %v603
        %v605 = vpop.f32.mrf.mxu0
        %v606 = vadd.f32 0.0, %v605
        %607 = vdwg.mxu0
        %v608 = vadd.f32 %v461, %v590
        %v609 = vadd.f32 %v475, %v604
        %v610 = vadd.f32 %v463, %v592
        %v611 = vadd.f32 %v477, %v606
        %v612 = vxor.u32 %v608, 2147483648
        %v613 = vxor.u32 %v609, 2147483648
        %v614 = vxor.u32 %v610, 2147483648
        %v615 = vxor.u32 %v611, 2147483648
        %v616 = vmul.f32 %v612, 1.442695
        %v617 = vpow.pop %v616
        %v618 = vmul.f32 %v613, 1.442695
        %v619 = vpow.pop %v618
        %v620 = vmul.f32 %v614, 1.442695
        %v621 = vpow.pop %v620
        %v622 = vmul.f32 %v615, 1.442695
        %v623 = vpow.pop %v622
        %v624 = vadd.f32 %v617, 1.0
        %v625 = vadd.f32 %v619, 1.0
        %v626 = vadd.f32 %v621, 1.0
        %v627 = vadd.f32 %v623, 1.0
        %v628 = vrcp.pop %v624
        %v629 = vmul.f32 %v624, %v628
        %v630 = vsub.f32 1.0, %v629
        %v631 = vmul.f32 %v628, %v630
        %v632 = vadd.f32 %v628, %v631
        %vm633 = vweird.f32 %v624
        %vm634 = vweird.f32 %v628
        %vm635 = vmor %vm633, %vm634
        %v636 = vsel %vm635, %v628, %v632
        %v637 = vand.u32 2147483647, %v624
        %vm638 = vcmp.eq.f32.partialorder %v637, 8.507059e+37
        %v639 = vand.u32 %v624, 2147483648
        %v640 = vor.u32 1.1754944e-38, %v639
        %v641 = vsel %vm638, %v640, %v636
        %v642 = vmul.f32 1.0, %v641
        %v643 = vrcp.pop %v625
        %v644 = vmul.f32 %v625, %v643
        %v645 = vsub.f32 1.0, %v644
        %v646 = vmul.f32 %v643, %v645
        %v647 = vadd.f32 %v643, %v646
        %vm648 = vweird.f32 %v625
        %vm649 = vweird.f32 %v643
        %vm650 = vmor %vm648, %vm649
        %v651 = vsel %vm650, %v643, %v647
        %v652 = vand.u32 2147483647, %v625
        %vm653 = vcmp.eq.f32.partialorder %v652, 8.507059e+37
        %v654 = vand.u32 %v625, 2147483648
        %v655 = vor.u32 1.1754944e-38, %v654
        %v656 = vsel %vm653, %v655, %v651
        %v657 = vmul.f32 1.0, %v656
        %v658 = vrcp.pop %v626
        %v659 = vmul.f32 %v626, %v658
        %v660 = vsub.f32 1.0, %v659
        %v661 = vmul.f32 %v658, %v660
        %v662 = vadd.f32 %v658, %v661
        %vm663 = vweird.f32 %v626
        %vm664 = vweird.f32 %v658
        %vm665 = vmor %vm663, %vm664
        %v666 = vsel %vm665, %v658, %v662
        %v667 = vand.u32 2147483647, %v626
        %vm668 = vcmp.eq.f32.partialorder %v667, 8.507059e+37
        %v669 = vand.u32 %v626, 2147483648
        %v670 = vor.u32 1.1754944e-38, %v669
        %v671 = vsel %vm668, %v670, %v666
        %v672 = vmul.f32 1.0, %v671
        %v673 = vrcp.pop %v627
        %v674 = vmul.f32 %v627, %v673
        %v675 = vsub.f32 1.0, %v674
        %v676 = vmul.f32 %v673, %v675
        %v677 = vadd.f32 %v673, %v676
        %vm678 = vweird.f32 %v627
        %vm679 = vweird.f32 %v673
        %vm680 = vmor %vm678, %vm679
        %v681 = vsel %vm680, %v673, %v677
        %v682 = vand.u32 2147483647, %v627
        %vm683 = vcmp.eq.f32.partialorder %v682, 8.507059e+37
        %v684 = vand.u32 %v627, 2147483648
        %v685 = vor.u32 1.1754944e-38, %v684
        %v686 = vsel %vm683, %v685, %v681
        %v687 = vmul.f32 1.0, %v686
        %v688 = vmul.f32 %v608, %v642
        %v689 = vmul.f32 %v609, %v657
        %v690 = vmul.f32 %v610, %v672
        %v691 = vmul.f32 %v611, %v687
        %v692 = vpack.c.bf16 %v690, %v688
        %v693 = vpack.c.bf16 %v691, %v689
        %v694 = vld [vmem:[#allocation4] sm:$0xf]
        %v695 = vld [vmem:[#allocation4 + $0x4] sm:$0xf]
        %v696 = vld [vmem:[#allocation4 + $0x8] sm:$0xf]
        %v697 = vld [vmem:[#allocation4 + $0xc] sm:$0xf]
        %v698 = vld [vmem:[#allocation4 + $0x10] sm:$0xf]
        %v699 = vld [vmem:[#allocation4 + $0x14] sm:$0xf]
        %v700 = vld [vmem:[#allocation4 + $0x18] sm:$0xf]
        %v701 = vld [vmem:[#allocation4 + $0x1c] sm:$0xf]
        %v702 = vld [vmem:[#allocation4 + $0x20] sm:$0xf]
        %v703 = vld [vmem:[#allocation4 + $0x24] sm:$0xf]
        %v704 = vld [vmem:[#allocation4 + $0x28] sm:$0xf]
        %v705 = vld [vmem:[#allocation4 + $0x2c] sm:$0xf]
        %v706 = vld [vmem:[#allocation4 + $0x30] sm:$0xf]
        %v707 = vld [vmem:[#allocation4 + $0x34] sm:$0xf]
        %v708 = vld [vmem:[#allocation4 + $0x38] sm:$0xf]
        %v709 = vld [vmem:[#allocation4 + $0x3c] sm:$0xf]
        %v710 = vld [vmem:[#allocation4 + $0x40] sm:$0xf]
        %v711 = vld [vmem:[#allocation4 + $0x44] sm:$0xf]
        %v712 = vld [vmem:[#allocation4 + $0x48] sm:$0xf]
        %v713 = vld [vmem:[#allocation4 + $0x4c] sm:$0xf]
        %v714 = vld [vmem:[#allocation4 + $0x50] sm:$0xf]
        %v715 = vld [vmem:[#allocation4 + $0x54] sm:$0xf]
        %v716 = vld [vmem:[#allocation4 + $0x58] sm:$0xf]
        %v717 = vld [vmem:[#allocation4 + $0x5c] sm:$0xf]
        %v718 = vld [vmem:[#allocation4 + $0x60] sm:$0xf]
        %v719 = vld [vmem:[#allocation4 + $0x64] sm:$0xf]
        %v720 = vld [vmem:[#allocation4 + $0x68] sm:$0xf]
        %v721 = vld [vmem:[#allocation4 + $0x6c] sm:$0xf]
        %v722 = vld [vmem:[#allocation4 + $0x70] sm:$0xf]
        %v723 = vld [vmem:[#allocation4 + $0x74] sm:$0xf]
        %v724 = vld [vmem:[#allocation4 + $0x78] sm:$0xf]
        %v725 = vld [vmem:[#allocation4 + $0x7c] sm:$0xf]
        %v758 = vunpack.c.l.b16 %v694
        %v759 = vunpack.c.l.b16 %v695
        %v760 = vunpack.c.l.b16 %v696
        %v761 = vunpack.c.l.b16 %v697
        %v762 = vunpack.c.l.b16 %v698
        %v763 = vunpack.c.l.b16 %v699
        %v764 = vunpack.c.l.b16 %v700
        %v765 = vunpack.c.l.b16 %v701
        %v766 = vunpack.c.l.b16 %v702
        %v767 = vunpack.c.l.b16 %v703
        %v768 = vunpack.c.l.b16 %v704
        %v769 = vunpack.c.l.b16 %v705
        %v770 = vunpack.c.l.b16 %v706
        %v771 = vunpack.c.l.b16 %v707
        %v772 = vunpack.c.l.b16 %v708
        %v773 = vunpack.c.l.b16 %v709
        %v774 = vunpack.c.l.b16 %v710
        %v775 = vunpack.c.l.b16 %v711
        %v776 = vunpack.c.l.b16 %v712
        %v777 = vunpack.c.l.b16 %v713
        %v778 = vunpack.c.l.b16 %v714
        %v779 = vunpack.c.l.b16 %v715
        %v780 = vunpack.c.l.b16 %v716
        %v781 = vunpack.c.l.b16 %v717
        %v782 = vunpack.c.l.b16 %v718
        %v783 = vunpack.c.l.b16 %v719
        %v784 = vunpack.c.l.b16 %v720
        %v785 = vunpack.c.l.b16 %v721
        %v786 = vunpack.c.l.b16 %v722
        %v787 = vunpack.c.l.b16 %v723
        %v788 = vunpack.c.l.b16 %v724
        %v789 = vunpack.c.l.b16 %v725
        %v790 = vpack.c.b16 %v759, %v758
        %v791 = vpack.c.b16 %v761, %v760
        %v792 = vpack.c.b16 %v763, %v762
        %v793 = vpack.c.b16 %v765, %v764
        %v794 = vpack.c.b16 %v767, %v766
        %v795 = vpack.c.b16 %v769, %v768
        %v796 = vpack.c.b16 %v771, %v770
        %v797 = vpack.c.b16 %v773, %v772
        %v798 = vpack.c.b16 %v775, %v774
        %v799 = vpack.c.b16 %v777, %v776
        %v800 = vpack.c.b16 %v779, %v778
        %v801 = vpack.c.b16 %v781, %v780
        %v802 = vpack.c.b16 %v783, %v782
        %v803 = vpack.c.b16 %v785, %v784
        %v804 = vpack.c.b16 %v787, %v786
        %v805 = vpack.c.b16 %v789, %v788
        %822 = vmatpush.bf16.msra.mxu0 %v797
        %823 = vmatpush.bf16.msra.mxu0 %v796
        %824 = vmatpush.bf16.msra.mxu0 %v795
        %825 = vmatpush.bf16.msra.mxu0 %v794
        %826 = vmatpush.bf16.msra.mxu0 %v793
        %827 = vmatpush.bf16.msra.mxu0 %v792
        %828 = vmatpush.bf16.msra.mxu0 %v791
        %829 = vmatpush.bf16.msra.mxu0 %v790
        %830 = vmatmul.bf16.gmra.mxu0 %v692
        %v831 = vpop.f32.mrf.mxu0
        %v832 = vadd.f32 0.0, %v831
        %v833 = vpop.f32.mrf.mxu0
        %v834 = vadd.f32 0.0, %v833
        %835 = vdwg.mxu0
        %836 = vmatpush.bf16.msra.mxu0 %v805
        %837 = vmatpush.bf16.msra.mxu0 %v804
        %838 = vmatpush.bf16.msra.mxu0 %v803
        %839 = vmatpush.bf16.msra.mxu0 %v802
        %840 = vmatpush.bf16.msra.mxu0 %v801
        %841 = vmatpush.bf16.msra.mxu0 %v800
        %842 = vmatpush.bf16.msra.mxu0 %v799
        %843 = vmatpush.bf16.msra.mxu0 %v798
        %844 = vmatmul.bf16.gmra.mxu0 %v693
        %v845 = vpop.f32.mrf.mxu0
        %v846 = vadd.f32 %v832, %v845
        %v847 = vpop.f32.mrf.mxu0
        %v848 = vadd.f32 %v834, %v847
        %849 = vdwg.mxu0
        %850 = vst [vmem:[%s204] sm:$0xff] %v846
        %851 = vst [vmem:[%s204 + $0x8] sm:$0xff] %v848
        %p852 = scmp.lt.s32.totalorder %s16, 1
        %s853 = scalar_select %p852, %s16, 1
        %s854 = smul.addr %s853, 2
        %s855 = smul.addr %s854, 8
        %s856 = scalar_lea.vmem %s3, %s855
        // Predicated region
        $region41: #{a_call__.1} parent=31 // pred_check
          %p857 = pneg %p102
        $region42: #{a_call__.1} parent=31 // pred_check_branch
          %859 = sbr.rel (%p857) target = $region44
        $region43: #{a_call__.1} parent=31 // pred_region
          _
        $region44: #{a_call__.1} parent=31 // pred_fallthru
          _
      $region32: #{a_call__.1} parent=5 // pred_fallthru
        _
      %p860 = scmp.le.s32.totalorder 2, %s11
      // Predicated region
      $region45: #{a_call__.1} parent=5 // pred_check
        %p861 = pneg %p860
      $region46: #{a_call__.1} parent=5 // pred_check_branch
        %863 = sbr.rel (%p861) target = $region48
      $region47: #{a_call__.1} parent=5 // pred_region
        %s864 = ssub.s32 %s11, 2
        // Predicated region
        $region49: #{a_call__.1} parent=47 // pred_check
          %p865 = pneg %p108
        $region50: #{a_call__.1} parent=47 // pred_check_branch
          %867 = sbr.rel (%p865) target = $region52
        $region51: #{a_call__.1} parent=47 // pred_region
          %p868 = scmp.lt.s32.totalorder %s17, 1
          %s869 = scalar_select %p868, %s17, 1
          %s870 = smul.addr %s869, 2
          %s871 = smul.addr %s870, 8
          %s872 = scalar_lea.vmem %s3, %s871
        $region52: #{a_call__.1} parent=47 // pred_fallthru
          _
      $region48: #{a_call__.1} parent=5 // pred_fallthru
        _
    $region6: #{a_call__.1} parent=1 // loop_footer
      %s15 = sadd.s32 1, %s11
    $region7: #{a_call__.1} parent=1 // loop_footer_branch
      %10 = sbr.rel target = $region3
    $region8: #{a_call__.1} parent=1 // loop_exit
      _
    %873 = vsyncpa [#allocation3], 1
    %s874 = scalar_lea.sflag [#allocation3], 1
    %875 = vsyncpa %s874, 1
    %876 = vsyncpa [#allocation5], 1

</llo_original>
